<compile_context>
chip_gen: v7x
topology: tpu7x:2x2x1
jax: 0.10.0
libtpu: 0.0.40
codegen_flags: <defaults>
</compile_context>

<pallas_src>
import functools

import jax
import jax.numpy as jnp
from jax.experimental import pallas as pl
from jax.experimental.pallas import tpu as pltpu


# ----------------------------- config (synthetic) -----------------------------
FREQ_MASK_PARAM = 4      # masks along freq axis (dim -1)   [TimeMasking in module]
TIME_MASK_PARAM = 3      # masks along time axis (dim -2)   [FrequencyMasking in module]
GAIN_PARAM = 6.0         # gain drawn uniformly in [-6, 6] dB
ROLLING_DISTANCE = 2     # roll shift drawn uniformly in [-2, 2] along time
ADD_NOISE = False        # module asserts this is False
MAX_LEN = 8              # center-trim along time to MAX_LEN rows

NUM_IPARAMS = 5          # per sample: [t_start, t_end, f_start, f_end, shift]


# ------------------------- random augmentation params --------------------------
def _draw_aug_params(key, T, F):
    """Per-sample random params (replaces Python `random` with jax.random)."""
    k_tv, k_tm, k_fv, k_fm, k_g, k_r = jax.random.split(key, 6)

    if TIME_MASK_PARAM > 0:   # FrequencyMasking(time_mask_param): span on dim -2
        t_val = jax.random.uniform(k_tv) * TIME_MASK_PARAM
        t_min = jax.random.uniform(k_tm) * (T - t_val)
        t_start = t_min.astype(jnp.int32)
        t_end = (t_min + t_val).astype(jnp.int32)
    else:
        t_start = jnp.int32(0)
        t_end = jnp.int32(0)

    if FREQ_MASK_PARAM > 0:   # TimeMasking(freq_mask_param): span on dim -1
        f_val = jax.random.uniform(k_fv) * FREQ_MASK_PARAM
        f_min = jax.random.uniform(k_fm) * (F - f_val)
        f_start = f_min.astype(jnp.int32)
        f_end = (f_min + f_val).astype(jnp.int32)
    else:
        f_start = jnp.int32(0)
        f_end = jnp.int32(0)

    if GAIN_PARAM > 0:        # F.gain: dB -> linear factor
        gain_db = jax.random.uniform(k_g, minval=-GAIN_PARAM, maxval=GAIN_PARAM)
        gain = jnp.power(jnp.float32(10.0), gain_db / 20.0)
    else:
        gain = jnp.float32(1.0)

    if ROLLING_DISTANCE > 0:  # random.randint(-d, d) inclusive
        shift = jax.random.randint(k_r, (), -ROLLING_DISTANCE, ROLLING_DISTANCE + 1)
    else:
        shift = jnp.int32(0)

    iparams = jnp.stack(
        [t_start, t_end, f_start, f_end, shift.astype(jnp.int32)]
    ).astype(jnp.int32)
    return iparams, gain.astype(jnp.float32)


# ----------------------------- pure-JAX reference --------------------------------
def _reference(wavs, iparams, gains):
    """Mask -> gain -> roll -> center-trim, per sample (also the wrap fallback)."""
    B, T, F = wavs.shape
    pre_trim = (max(T, MAX_LEN) - MAX_LEN) // 2
    out_len = min(T, MAX_LEN)

    def one(wav, p, g):
        t_idx = jnp.arange(T, dtype=jnp.int32)[:, None]
        f_idx = jnp.arange(F, dtype=jnp.int32)[None, :]
        mask = ((t_idx >= p[0]) & (t_idx < p[1])) | ((f_idx >= p[2]) & (f_idx < p[3]))
        x = jnp.where(mask, 0.0, wav) * g
        x = jnp.roll(x, p[4], axis=0)
        return jax.lax.dynamic_slice_in_dim(x, pre_trim, out_len, axis=0)

    return jax.vmap(one)(wavs, iparams, gains)


# --------------------------------- kernel -------------------------------------
def transform_kernel(iparams_ref, gain_ref, wav_ref, out_ref, *,
                     pre_trim, max_shift, block_b):
    """iparams (SMEM i32[B_pad*5]): flat per-sample [t_start,t_end,f_start,f_end,shift]
    gain    (SMEM f32[B_pad])   : per-sample linear gain factor 10**(dB/20)
    wav     (VMEM f32[Bt,Lw,F]) : this step's window rows (Lw = L + 2*max_shift);
                                  window row w == original time row (pre_trim - max_shift + w)
    out     (VMEM f32[Bt,L,F])  : masked + gained + rolled, center-trimmed output
    """
    L = out_ref.shape[1]
    F = out_ref.shape[2]
    base = pl.program_id(0) * block_b

    # Hoisted once per grid step, reused by all Bt samples (no CSE of broadcasts).
    f_iota = jax.lax.broadcasted_iota(jnp.int32, (1, F), 1)    # lane iota    (1, F)
    t_iota = jax.lax.broadcasted_iota(jnp.int32, (L, 1), 0)    # sublane iota (L, 1)

    def body(i, carry):
        g = base + i
        p = g * NUM_IPARAMS
        t_start = iparams_ref[p + 0]
        t_end = iparams_ref[p + 1]
        f_start = iparams_ref[p + 2]
        f_end = iparams_ref[p + 3]
        shift = iparams_ref[p + 4]
        gain = gain_ref[g]

        # Output row j == original row (pre_trim + j - shift)
        #              == window  row (max_shift + j - shift); never wraps on this
        # path (the wrapper guarantees it statically), so roll + center-trim is a
        # single dynamic row slice -- no MXU, no XLU roll.
        start = max_shift - shift                              # in [0, 2*max_shift]
        rows = wav_ref[i, pl.ds(start, L), :]                  # (L, F)

        t_idx = t_iota + (pre_trim - shift)                    # original time indices
        time_mask = (t_idx >= t_start) & (t_idx < t_end)       # (L, 1)
        freq_mask = (f_iota >= f_start) & (f_iota < f_end)     # (1, F)
        # Mask value is 0 -> folding the gain into the same where is exact.
        out = jnp.where(time_mask | freq_mask, jnp.float32(0.0), rows * gain)
        out_ref[i] = out.astype(out_ref.dtype)
        return carry

    jax.lax.fori_loop(0, block_b, body, 0, unroll=True)


# ------------------------------ tile selection ---------------------------------
@functools.lru_cache(maxsize=1)
def _pipeline_vmem_budget_bytes():
    """Conservative VMEM budget for the double-buffered in+out blocks."""
    try:
        cap = int(pltpu.get_tpu_info().vmem_capacity_bytes)  # 64 MiB v7x, 128 MiB v5e/v6e
    except Exception:
        cap = 64 * 1024 * 1024                               # assume the smaller v7x VMEM
    return max(cap // 8, 1 << 20)


def _pick_block_b(B, Lw, L, F):
    """Samples per grid step: amortize per-step overhead, fit VMEM (v7x-safe),
    and keep >= 2 grid blocks so both v7x TensorCores get work."""
    bytes_per_sample = (Lw + L) * F * 4
    bt = _pipeline_vmem_budget_bytes() // (2 * 2 * bytes_per_sample)  # 2x dbl-buffer, in+out
    bt = int(max(1, min(bt, 64, B)))   # 64 also caps the unrolled in-kernel loop length
    if B >= 2:
        bt = min(bt, pl.cdiv(B, 2))    # >= 2 "parallel" blocks -> both TCs on v7x
    return max(1, bt)


# --------------------------------- wrapper --------------------------------------
@jax.jit
def transform_batch(wavs, key):
    """Pallas equivalent of Transform.forward applied per-sample to (B, T, F)."""
    B, T, F = wavs.shape
    assert ADD_NOISE is False  # mirrors the module's assert
    # TODO(synk): add_noise branch is asserted False in the module; nothing to implement.

    keys = jax.random.split(key, B)
    iparams, gains = jax.vmap(lambda k: _draw_aug_params(k, T, F))(keys)  # (B,5) i32, (B,) f32

    # Static trim / roll geometry.
    pre_trim = (max(T, MAX_LEN) - MAX_LEN) // 2
    out_len = min(T, MAX_LEN)
    max_shift = max(ROLLING_DISTANCE, 0)

    # Non-wrapping window precondition: every output row comes from original rows
    # [pre_trim - max_shift, pre_trim + out_len + max_shift).
    window_ok = (pre_trim - max_shift >= 0) and (pre_trim + out_len + max_shift <= T)
    if not window_ok:
        # Wrapping torch.roll / degenerate trim: tiny pure-JAX path, same semantics
        # (avoids pltpu.roll with a dynamic per-sample shift inside the kernel).
        return _reference(wavs, iparams, gains)
    # NOTE: for tiny B*T*F a plain XLA fusion (_reference) is also competitive;
    # the Pallas path is kept unconditional here so the kernel is exercised.

    # (2) DMA only the rows that can reach the output.
    lo = pre_trim - max_shift
    Lw = out_len + 2 * max_shift
    window = wavs[:, lo:lo + Lw, :]                              # (B, Lw, F) static slice

    # (1) + (4) batch tiling.
    bt = _pick_block_b(B, Lw, out_len, F)
    n_blocks = pl.cdiv(B, bt)
    B_pad = n_blocks * bt
    if B_pad != B:
        pad = B_pad - B
        window = jnp.concatenate([window, jnp.zeros((pad, Lw, F), window.dtype)], axis=0)
        iparams = jnp.concatenate(
            [iparams, jnp.zeros((pad, NUM_IPARAMS), iparams.dtype)], axis=0)
        gains = jnp.concatenate([gains, jnp.zeros((pad,), gains.dtype)], axis=0)

    # (3) flat 1D SMEM params (a [B,5] SMEM array would pad to [ceil(B/8)*8, 128] words).
    iparams_flat = iparams.reshape(-1)

    kernel = functools.partial(transform_kernel, pre_trim=pre_trim,
                               max_shift=max_shift, block_b=bt)

    out = pl.pallas_call(
        kernel,
        out_shape=jax.ShapeDtypeStruct((B_pad, out_len, F), jnp.float32),
        grid=(n_blocks,),
        in_specs=[
            pl.BlockSpec(memory_space=pltpu.MemorySpace.SMEM),   # iparams_flat (B_pad*5,)
            pl.BlockSpec(memory_space=pltpu.MemorySpace.SMEM),   # gains (B_pad,)
            pl.BlockSpec((bt, Lw, F), lambda b: (b, 0, 0)),      # Bt-sample window block
        ],
        out_specs=pl.BlockSpec((bt, out_len, F), lambda b: (b, 0, 0)),
        compiler_params=pltpu.CompilerParams(
            dimension_semantics=("parallel",),   # independent batch blocks -> 2 TCs on v7x
        ),
    )(iparams_flat, gains, window)
    return out[:B]


def transform(wav, key):
    """Single-sample (T, F) convenience wrapper."""
    return transform_batch(wav[None], key)[0]


# ---------------------------------- main ---------------------------------------
if __name__ == "__main__":
    key = jax.random.PRNGKey(0)
    k_data1, k_aug1, k_data2, k_aug2 = jax.random.split(key, 4)

    T, F = 16, 32   # small (time, freq) spectrograms; T > MAX_LEN

    # Case 1: B=2 -> Bt=1, grid=2 (two "parallel" blocks, one sample each).
    B1 = 2
    wavs1 = jax.random.normal(k_data1, (B1, T, F), dtype=jnp.float32)
    out1 = jax.block_until_ready(transform_batch(wavs1, k_aug1))
    assert out1.shape == (B1, MAX_LEN, F), out1.shape
    assert out1.dtype == jnp.float32
    keys1 = jax.random.split(k_aug1, B1)
    ip1, g1 = jax.vmap(lambda k: _draw_aug_params(k, T, F))(keys1)
    ref1 = _reference(wavs1, ip1, g1)
    assert jnp.allclose(out1, ref1, atol=1e-6), float(jnp.max(jnp.abs(out1 - ref1)))

    # Case 2: B=5 -> Bt=3, grid=2 (multi-sample unrolled loop + batch padding).
    B2 = 5
    wavs2 = jax.random.normal(k_data2, (B2, T, F), dtype=jnp.float32)
    out2 = jax.block_until_ready(transform_batch(wavs2, k_aug2))
    assert out2.shape == (B2, MAX_LEN, F), out2.shape
    keys2 = jax.random.split(k_aug2, B2)
    ip2, g2 = jax.vmap(lambda k: _draw_aug_params(k, T, F))(keys2)
    ref2 = _reference(wavs2, ip2, g2)
    assert jnp.allclose(out2, ref2, atol=1e-6), float(jnp.max(jnp.abs(out2 - ref2)))

    print("KERNEL_OK")
</pallas_src>

<mosaic_0001>
module attributes {stable_mosaic.version = 11 : i64} {
  func.func @transform_kernel(%arg0: i32, %arg1: memref<10xi32, #tpu.memory_space<smem>>, %arg2: memref<2xf32, #tpu.memory_space<smem>>, %arg3: memref<1x12x32xf32, #tpu.memory_space<vmem>>, %arg4: memref<1x8x32xf32, #tpu.memory_space<vmem>>) attributes {dimension_semantics = [#tpu.dimension_semantics<parallel>], iteration_bounds = array<i64: 2>, scalar_prefetch = 0 : i64, scratch_operands = 0 : i64, tpu.core_type = #tpu.core_type<tc>, window_params = [{transform_indices = @transform_0, window_bounds = array<i64: 10>}, {transform_indices = @transform_1, window_bounds = array<i64: 2>}, {transform_indices = @transform_2, window_bounds = array<i64: 1, 12, 32>}, {transform_indices = @transform_3, window_bounds = array<i64: 1, 8, 32>}]} {
    %c1_i32 = arith.constant 1 : i32
    %0 = arith.muli %arg0, %c1_i32 : i32
    %1 = tpu.iota {dimensions = array<i32: 1>} : vector<1x32xi32>
    %2 = tpu.iota {dimensions = array<i32: 0>} : vector<8x1xi32>
    %c0_i32 = arith.constant 0 : i32
    %3 = arith.addi %0, %c0_i32 : i32
    %c5_i32 = arith.constant 5 : i32
    %4 = arith.muli %3, %c5_i32 : i32
    %c0_i32_0 = arith.constant 0 : i32
    %5 = arith.addi %4, %c0_i32_0 : i32
    %6 = arith.index_cast %5 : i32 to index
    %7 = memref.load %arg1[%6] : memref<10xi32, #tpu.memory_space<smem>>
    %c1_i32_1 = arith.constant 1 : i32
    %8 = arith.addi %4, %c1_i32_1 : i32
    %9 = arith.index_cast %8 : i32 to index
    %10 = memref.load %arg1[%9] : memref<10xi32, #tpu.memory_space<smem>>
    %c2_i32 = arith.constant 2 : i32
    %11 = arith.addi %4, %c2_i32 : i32
    %12 = arith.index_cast %11 : i32 to index
    %13 = memref.load %arg1[%12] : memref<10xi32, #tpu.memory_space<smem>>
    %c3_i32 = arith.constant 3 : i32
    %14 = arith.addi %4, %c3_i32 : i32
    %15 = arith.index_cast %14 : i32 to index
    %16 = memref.load %arg1[%15] : memref<10xi32, #tpu.memory_space<smem>>
    %c4_i32 = arith.constant 4 : i32
    %17 = arith.addi %4, %c4_i32 : i32
    %18 = arith.index_cast %17 : i32 to index
    %19 = memref.load %arg1[%18] : memref<10xi32, #tpu.memory_space<smem>>
    %20 = arith.index_cast %3 : i32 to index
    %21 = memref.load %arg2[%20] : memref<2xf32, #tpu.memory_space<smem>>
    %c2_i32_2 = arith.constant 2 : i32
    %22 = arith.subi %c2_i32_2, %19 : i32
    %23 = arith.index_cast %c0_i32 : i32 to index
    %24 = arith.index_cast %22 : i32 to index
    %c0 = arith.constant 0 : index
    %25 = vector.load %arg3[%23, %24, %c0] : memref<1x12x32xf32, #tpu.memory_space<vmem>>, vector<1x8x32xf32>
    %26 = vector.shape_cast %25 : vector<1x8x32xf32> to vector<8x32xf32>
    %c4_i32_3 = arith.constant 4 : i32
    %27 = arith.subi %c4_i32_3, %19 : i32
    %28 = vector.broadcast %27 : i32 to vector<8x1xi32>
    %29 = arith.addi %2, %28 : vector<8x1xi32>
    %30 = vector.broadcast %7 : i32 to vector<8x1xi32>
    %31 = arith.cmpi sge, %29, %30 : vector<8x1xi32>
    %32 = vector.broadcast %10 : i32 to vector<8x1xi32>
    %33 = arith.cmpi slt, %29, %32 : vector<8x1xi32>
    %34 = arith.andi %31, %33 : vector<8x1xi1>
    %35 = vector.broadcast %13 : i32 to vector<1x32xi32>
    %36 = arith.cmpi sge, %1, %35 : vector<1x32xi32>
    %37 = vector.broadcast %16 : i32 to vector<1x32xi32>
    %38 = arith.cmpi slt, %1, %37 : vector<1x32xi32>
    %39 = arith.andi %36, %38 : vector<1x32xi1>
    %40 = vector.broadcast %34 : vector<8x1xi1> to vector<8x32xi1>
    %41 = vector.broadcast %39 : vector<1x32xi1> to vector<8x32xi1>
    %42 = arith.ori %40, %41 : vector<8x32xi1>
    %43 = vector.broadcast %21 : f32 to vector<8x32xf32>
    %44 = arith.mulf %26, %43 : vector<8x32xf32>
    %cst = arith.constant 0.000000e+00 : f32
    %45 = vector.broadcast %cst : f32 to vector<8x32xf32>
    %46 = arith.select %42, %45, %44 : vector<8x32xi1>, vector<8x32xf32>
    %47 = arith.index_cast %c0_i32 : i32 to index
    %c0_4 = arith.constant 0 : index
    %c0_5 = arith.constant 0 : index
    %48 = vector.load %arg4[%47, %c0_4, %c0_5] : memref<1x8x32xf32, #tpu.memory_space<vmem>>, vector<1x8x32xf32>
    %49 = vector.shape_cast %48 : vector<1x8x32xf32> to vector<8x32xf32>
    %50 = vector.shape_cast %46 : vector<8x32xf32> to vector<1x8x32xf32>
    tpu.vector_store %arg4[%47, %c0_4, %c0_5], %50 {strides = array<i32>} : memref<1x8x32xf32, #tpu.memory_space<vmem>>, vector<1x8x32xf32>,
    %c1_i32_6 = arith.constant 1 : i32
    return
  }
  func.func @transform_0(%arg0: i32) -> i32 {
    %c0_i32 = arith.constant 0 : i32
    %c0_i32_0 = arith.constant 0 : i32
    return %c0_i32 : i32
  }
  func.func @transform_1(%arg0: i32) -> i32 {
    %c0_i32 = arith.constant 0 : i32
    %c0_i32_0 = arith.constant 0 : i32
    return %c0_i32 : i32
  }
  func.func @transform_2(%arg0: i32) -> (i32, i32, i32) {
    %c0_i32 = arith.constant 0 : i32
    %c0_i32_0 = arith.constant 0 : i32
    %c0_i32_1 = arith.constant 0 : i32
    return %arg0, %c0_i32, %c0_i32_0 : i32, i32, i32
  }
  func.func @transform_3(%arg0: i32) -> (i32, i32, i32) {
    %c0_i32 = arith.constant 0 : i32
    %c0_i32_0 = arith.constant 0 : i32
    %c0_i32_1 = arith.constant 0 : i32
    return %arg0, %c0_i32, %c0_i32_0 : i32, i32, i32
  }
}

</mosaic_0001>

<llo_original>
// kernel: transform_batch.1
$region0: #{transform_batch.1}
  #allocation0 [shape = 'u32[]', space=smem, size = 0x4, offset = 0x4, fixed_abs, tag = 'smem constant byte address 0x4 - core index']
  #allocation1 [shape = 'u32[144,128]{1,0:T(1,128)}', space=vmem, size = 0x12000, scoped, tag = 'internal scratch']
  %s0 = inlined_call_operand.vmem [shape: s32[10], index: 0, kind: input, shape index: {}]
  %s1 = inlined_call_operand.vmem [shape: f32[2], index: 1, kind: input, shape index: {}]
  %s2 = inlined_call_operand.vmem [shape: f32[2,12,32], index: 2, kind: input, shape index: {}]
  %s3 = inlined_call_operand.hbm [shape: f32[2,8,32], index: 3, kind: output, shape index: {}]
  %s4 = sld [smem:[#allocation0]]
  $region53: #{transform_batch.1} parent=0
    _
  %s6 = ssub.s32 1, %s4
  %s7 = scalar_select 0, %s6, %s4
  $region1: #{transform_batch.1} parent=0
    #allocation2 [shape = 'u8[512]{0}', space=smem, size = 0x200, scoped, tag = 'input window, operand 0, single buffered']
    #allocation3 [shape = 's32[2]{0}', space=sflag, size = 0x8, scoped, tag = 'scoped memory for transform_batch.1']
    #allocation4 [shape = 's32[2]{0}', space=sflag, size = 0x8, scoped, tag = 'scoped memory for transform_batch.1']
    #allocation5 [shape = 'u8[512]{0}', space=smem, size = 0x200, scoped, tag = 'input window, operand 1, single buffered']
    #allocation6 [shape = 's32[1]{0}', space=sflag, size = 0x4, scoped, tag = 'scoped memory for transform_batch.1']
    #allocation7 [shape = 'u8[8192]{0}', space=vmem, size = 0x2000, scoped, tag = 'output window, operand 0']
    %8 = vsyncpa [#allocation4], 0
    %9 = vsyncpa [#allocation6], 0
    %10 = vsyncpa [#allocation3], 0
    %s11 = scalar_lea.sflag [#allocation3], 1
    %12 = vsyncpa %s11, 0
    loop: start=0, step=1, limit=4
    $region2: #{transform_batch.1} parent=1 // loop_pre_header
      _
    $region3: #{transform_batch.1} parent=1 // loop_header
      %s14 = sphi 0, %s18
      %p15 = scmp.ge.s32.totalorder %s14, 4
      %s22 = sphi 0, %s22
      %s24 = sphi 0, %s22
      %s25 = sphi 0, %s24
      %s39 = sphi 0, %s25
      %s43 = sphi 0, %s43
      %s45 = sphi 0, %s43
      %s46 = sphi 0, %s45
      %s60 = sphi 0, %s46
      %s66 = sphi 0, %s68
      %s69 = sphi 0, %s66
      %s70 = sphi 0, %s69
      %s86 = sphi 0, %s70
      %s92 = sphi 0, %s94
      %s95 = sphi 0, %s92
      %s96 = sphi 0, %s95
      %s112 = sphi 0, %s96
    $region4: #{transform_batch.1} parent=1 // loop_header_branch
      %17 = sbr.rel (%p15) target = $region8
    $region5: #{transform_batch.1} parent=1 // loop_body
      %s19 = ssub.s32 %s14, 1
      %s20 = ssub.s32 %s14, 2
      %s21 = sadd.s32 %s14, 1
      %s23 = sadd.s32 %s22, 1
      %p26 = scmp.eq.s32.totalorder %s14, 1
      %p27 = scmp.ne.s32.totalorder %s22, %s24
      %p28 = scmp.eq.s32.totalorder %s14, 0
      %p29 = por %p27, %p28
      %p30 = scmp.ne.s32.totalorder %s22, %s24
      %p31 = scmp.eq.s32.totalorder %s19, 1
      %p32 = por %p30, %p31
      %p33 = scmp.ne.s32.totalorder %s24, %s25
      %p34 = scmp.eq.s32.totalorder %s19, 0
      %p35 = por %p33, %p34
      %p36 = scmp.ne.s32.totalorder %s24, %s25
      %p37 = scmp.eq.s32.totalorder %s20, 1
      %p38 = por %p36, %p37
      %p40 = scmp.ne.s32.totalorder %s25, %s39
      %p41 = scmp.eq.s32.totalorder %s20, 0
      %p42 = por %p40, %p41
      %s44 = sadd.s32 %s43, 1
      %p47 = scmp.eq.s32.totalorder %s14, 1
      %p48 = scmp.ne.s32.totalorder %s43, %s45
      %p49 = scmp.eq.s32.totalorder %s14, 0
      %p50 = por %p48, %p49
      %p51 = scmp.ne.s32.totalorder %s43, %s45
      %p52 = scmp.eq.s32.totalorder %s19, 1
      %p53 = por %p51, %p52
      %p54 = scmp.ne.s32.totalorder %s45, %s46
      %p55 = scmp.eq.s32.totalorder %s19, 0
      %p56 = por %p54, %p55
      %p57 = scmp.ne.s32.totalorder %s45, %s46
      %p58 = scmp.eq.s32.totalorder %s20, 1
      %p59 = por %p57, %p58
      %p61 = scmp.ne.s32.totalorder %s46, %s60
      %p62 = scmp.eq.s32.totalorder %s20, 0
      %p63 = por %p61, %p62
      %s64 = ssub.s32 %s14, %s21
      %p65 = scmp.eq.s32.totalorder %s64, 0
      %s67 = sadd.s32 %s66, 1
      %s68 = scalar_select %p65, %s66, %s67
      %p71 = pneg %p65
      %p72 = scmp.eq.s32.totalorder %s14, 1
      %p73 = por %p71, %p72
      %p74 = scmp.ne.s32.totalorder %s66, %s69
      %p75 = scmp.eq.s32.totalorder %s14, 0
      %p76 = por %p74, %p75
      %p77 = scmp.ne.s32.totalorder %s66, %s69
      %p78 = scmp.eq.s32.totalorder %s19, 1
      %p79 = por %p77, %p78
      %p80 = scmp.ne.s32.totalorder %s69, %s70
      %p81 = scmp.eq.s32.totalorder %s19, 0
      %p82 = por %p80, %p81
      %p83 = scmp.ne.s32.totalorder %s69, %s70
      %p84 = scmp.eq.s32.totalorder %s20, 1
      %p85 = por %p83, %p84
      %p87 = scmp.ne.s32.totalorder %s70, %s86
      %p88 = scmp.eq.s32.totalorder %s20, 0
      %p89 = por %p87, %p88
      %s90 = ssub.s32 %s14, %s21
      %p91 = scmp.eq.s32.totalorder %s90, 0
      %s93 = sadd.s32 %s92, 1
      %s94 = scalar_select %p91, %s92, %s93
      %p97 = pneg %p91
      %p98 = scmp.eq.s32.totalorder %s14, 1
      %p99 = por %p97, %p98
      %p100 = scmp.ne.s32.totalorder %s92, %s95
      %p101 = scmp.eq.s32.totalorder %s14, 0
      %p102 = por %p100, %p101
      %p103 = scmp.ne.s32.totalorder %s92, %s95
      %p104 = scmp.eq.s32.totalorder %s19, 1
      %p105 = por %p103, %p104
      %p106 = scmp.ne.s32.totalorder %s95, %s96
      %p107 = scmp.eq.s32.totalorder %s19, 0
      %p108 = por %p106, %p107
      %p109 = scmp.ne.s32.totalorder %s95, %s96
      %p110 = scmp.eq.s32.totalorder %s20, 1
      %p111 = por %p109, %p110
      %p113 = scmp.ne.s32.totalorder %s96, %s112
      %p114 = scmp.eq.s32.totalorder %s20, 0
      %p115 = por %p113, %p114
      %p116 = scmp.le.s32.totalorder 1, %s14
      %p117 = scmp.lt.s32.totalorder %s14, 3
      %p118 = pnand %p116, %p117
      %p119 = pneg %p118
      // Predicated region
      $region9: #{transform_batch.1} parent=5 // pred_check
        _
      $region10: #{transform_batch.1} parent=5 // pred_check_branch
        %121 = sbr.rel (%p118) target = $region12
      $region11: #{transform_batch.1} parent=5 // pred_region
        %s122 = ssub.s32 %s14, 1
        // Predicated region
        $region13: #{transform_batch.1} parent=11 // pred_check
          %p123 = pneg %p35
        $region14: #{transform_batch.1} parent=11 // pred_check_branch
          %125 = sbr.rel (%p123) target = $region16
        $region15: #{transform_batch.1} parent=11 // pred_region
          %s127 = ssub.s32 16, 16
          %128 = vsyncadd [#allocation4], %s127
          %s130 = sshll.u32 %s0, 4
          %s131 = int_to_ptr.vmem [resolvable:$true] %s130
          %133 = dma.vmem_to_smem %s131, 16, [#allocation2], [#allocation4]
        $region16: #{transform_batch.1} parent=11 // pred_fallthru
          _
        // Predicated region
        $region17: #{transform_batch.1} parent=11 // pred_check
          %p134 = pneg %p56
        $region18: #{transform_batch.1} parent=11 // pred_check_branch
          %136 = sbr.rel (%p134) target = $region20
        $region19: #{transform_batch.1} parent=11 // pred_region
          %s138 = ssub.s32 16, 16
          %139 = vsyncadd [#allocation6], %s138
          %s141 = sshll.u32 %s1, 4
          %s142 = int_to_ptr.vmem [resolvable:$true] %s141
          %144 = dma.vmem_to_smem %s142, 16, [#allocation5], [#allocation6]
        $region20: #{transform_batch.1} parent=11 // pred_fallthru
          _
      $region12: #{transform_batch.1} parent=5 // pred_fallthru
        _
      %p145 = scmp.lt.s32.totalorder %s14, 2
      // Predicated region
      $region21: #{transform_batch.1} parent=5 // pred_check
        %p146 = pneg %p145
      $region22: #{transform_batch.1} parent=5 // pred_check_branch
        %148 = sbr.rel (%p146) target = $region24
      $region23: #{transform_batch.1} parent=5 // pred_region
        // Predicated region
        $region25: #{transform_batch.1} parent=23 // pred_check
          %p149 = pneg %p76
        $region26: #{transform_batch.1} parent=23 // pred_check_branch
          %151 = sbr.rel (%p149) target = $region28
        $region27: #{transform_batch.1} parent=23 // pred_region
          %p152 = scmp.lt.s32.totalorder %s14, 1
          %s153 = scalar_select %p152, %s14, 1
          %s154 = smul.addr %s153, 2
          %s155 = smul.addr %s154, 8
          %s156 = scalar_lea.vmem %s2, %s155
        $region28: #{transform_batch.1} parent=23 // pred_fallthru
          _
      $region24: #{transform_batch.1} parent=5 // pred_fallthru
        _
      %p157 = scmp.le.s32.totalorder 1, %s14
      %p158 = scmp.lt.s32.totalorder %s14, 3
      %p159 = pnand %p157, %p158
      %p160 = pneg %p159
      // Predicated region
      $region29: #{transform_batch.1} parent=5 // pred_check
        _
      $region30: #{transform_batch.1} parent=5 // pred_check_branch
        %162 = sbr.rel (%p159) target = $region32
      $region31: #{transform_batch.1} parent=5 // pred_region
        %s163 = ssub.s32 %s14, 1
        // Predicated region
        $region33: #{transform_batch.1} parent=31 // pred_check
          %p164 = pneg %p35
        $region34: #{transform_batch.1} parent=31 // pred_check_branch
          %166 = sbr.rel (%p164) target = $region36
        $region35: #{transform_batch.1} parent=31 // pred_region
          %167 = dma.done [#allocation4], 16
        $region36: #{transform_batch.1} parent=31 // pred_fallthru
          _
        // Predicated region
        $region37: #{transform_batch.1} parent=31 // pred_check
          %p168 = pneg %p56
        $region38: #{transform_batch.1} parent=31 // pred_check_branch
          %170 = sbr.rel (%p168) target = $region40
        $region39: #{transform_batch.1} parent=31 // pred_region
          %171 = dma.done [#allocation6], 16
        $region40: #{transform_batch.1} parent=31 // pred_fallthru
          _
        %172 = sfence
        %p173 = pneg %p35
        %p174 = pneg %p32
        %p175 = pneg %p56
        %p176 = pneg %p53
        %p177 = scmp.lt.s32.totalorder %s19, 1
        %s178 = scalar_select %p177, %s19, 1
        %s179 = smul.addr %s178, 2
        %s180 = smul.addr %s179, 8
        %s181 = scalar_lea.vmem %s2, %s180
        %p182 = pneg %p82
        %p183 = pneg %p79
        %p184 = pneg %p108
        %p185 = pneg %p105
        %s186 = sand.u32 %s95, 1
        %s187 = scalar_lea.sflag [#allocation3], %s186
        %s188 = sand.u32 %s95, 1
        %s189 = smul.addr %s188, 8
        %s190 = scalar_lea.vmem [#allocation7], %s189
        %p191 = scmp.lt.s32.totalorder %s19, 1
        %s192 = scalar_select %p191, %s19, 1
        %s193 = smul.addr %s192, 2
        %s194 = smul.addr %s193, 8
        %s195 = scalar_lea.vmem %s2, %s194
        %v196 = vlaneseq
        %v197 = vand.u32 %v196, 127
        %v198 = vlaneseq
        %v199 = vshrl.u32 %v198, 7
        %s200 = smul.u32 %s19, 5
        %s201 = sld [smem:[#allocation2 + %s200]]
        %s202 = sadd.s32 %s200, 1
        %s203 = sld [smem:[#allocation2 + %s202]]
        %s204 = sadd.s32 %s200, 2
        %s205 = sld [smem:[#allocation2 + %s204]]
        %s206 = sadd.s32 %s200, 3
        %s207 = sld [smem:[#allocation2 + %s206]]
        %s208 = sadd.s32 %s200, 4
        %s209 = sld [smem:[#allocation2 + %s208]]
        %s210 = sld [smem:[#allocation5 + %s19]]
        %s211 = ssub.s32 2, %s209
        %s212 = scalar_lea.vmem %s195, %s211
        %v213 = vld [vmem:[%s212] sm:$0xff]
        %s214 = ssub.s32 4, %s209
        %v215 = vstv %s214
        %v216 = vadd.s32 %v199, %v215
        %v217 = vstv %s201
        %vm218 = vcmp.ge.s32.totalorder %v216, %v217
        %v219 = vstv %s203
        %vm220 = vcmp.lt.s32.totalorder %v216, %v219
        %vm221 = vmand %vm218, %vm220
        %v222 = vstv %s205
        %vm223 = vcmp.ge.s32.totalorder %v197, %v222
        %v224 = vstv %s207
        %vm225 = vcmp.lt.s32.totalorder %v197, %v224
        %vm226 = vmand %vm223, %vm225
        %v227 = vsel %vm221, 1, 0
        %vm228 = vcmp.eq.s32.totalorder %v227, 1
        %v229 = vsel %vm226, 1, 0
        %vm230 = vcmp.eq.s32.totalorder %v229, 1
        %vm231 = vmor %vm228, %vm230
        %v232 = vstv %s210
        %v233 = vmul.f32 %v213, %v232
        %v234 = vsel %vm231, 0.0, %v233
        %vm235 = vcmask 261120
        %236 = vst.msk [vmem:[%s190] sm:$0xff] %vm235, %v234
        %s237 = sand.u32 %s95, 1
        %s238 = scalar_lea.sflag [#allocation3], %s237
        %s239 = sand.u32 %s95, 1
        %s240 = smul.addr %s239, 8
        %s241 = scalar_lea.vmem [#allocation7], %s240
        // Predicated region
        $region41: #{transform_batch.1} parent=31 // pred_check
          %p242 = pneg %p105
        $region42: #{transform_batch.1} parent=31 // pred_check_branch
          %244 = sbr.rel (%p242) target = $region44
        $region43: #{transform_batch.1} parent=31 // pred_region
          %s246 = ssub.s32 128, 128
          %247 = vsyncadd %s238, %s246
          %s248 = smul.addr %s19, 128
          %s249 = scalar_lea.hbm %s3, %s248
          %s251 = sshll.u32 %s241, 4
          %s252 = int_to_ptr.vmem [resolvable:$true] %s251
          %254 = dma.vmem_to_hbm [thread:$0]  %s252, 128, %s249, %s238
        $region44: #{transform_batch.1} parent=31 // pred_fallthru
          _
      $region32: #{transform_batch.1} parent=5 // pred_fallthru
        _
      %p255 = scmp.le.s32.totalorder 2, %s14
      // Predicated region
      $region45: #{transform_batch.1} parent=5 // pred_check
        %p256 = pneg %p255
      $region46: #{transform_batch.1} parent=5 // pred_check_branch
        %258 = sbr.rel (%p256) target = $region48
      $region47: #{transform_batch.1} parent=5 // pred_region
        %s259 = ssub.s32 %s14, 2
        // Predicated region
        $region49: #{transform_batch.1} parent=47 // pred_check
          %p260 = pneg %p111
        $region50: #{transform_batch.1} parent=47 // pred_check_branch
          %262 = sbr.rel (%p260) target = $region52
        $region51: #{transform_batch.1} parent=47 // pred_region
          %s263 = sand.u32 %s96, 1
          %s264 = scalar_lea.sflag [#allocation3], %s263
          %s265 = sand.u32 %s96, 1
          %s266 = smul.addr %s265, 8
          %s267 = scalar_lea.vmem [#allocation7], %s266
          %268 = dma.done %s264, 128
        $region52: #{transform_batch.1} parent=47 // pred_fallthru
          _
      $region48: #{transform_batch.1} parent=5 // pred_fallthru
        _
    $region6: #{transform_batch.1} parent=1 // loop_footer
      %s18 = sadd.s32 1, %s14
    $region7: #{transform_batch.1} parent=1 // loop_footer_branch
      %13 = sbr.rel target = $region3
    $region8: #{transform_batch.1} parent=1 // loop_exit
      _
    %269 = vsyncpa [#allocation3], 1
    %s270 = scalar_lea.sflag [#allocation3], 1
    %271 = vsyncpa %s270, 1
    %272 = vsyncpa [#allocation4], 1
    %s273 = scalar_lea.sflag [#allocation4], 1
    %274 = vsyncpa %s273, 1
    %275 = vsyncpa [#allocation6], 1

</llo_original>
